<compile_context>
chip_gen: v6e
topology: v6e:2x2x1
jax: 0.10.0
libtpu: 0.0.40
codegen_flags: <defaults>
</compile_context>

<pallas_src>
import functools

import jax
import jax.numpy as jnp
import numpy as np
from jax.experimental import pallas as pl
from jax.experimental.pallas import tpu as pltpu


def _avga_kernel(a_ref, x_ref, w1f_ref, t1_ref, w2f_ref, t2_ref, o_ref,
                 *, head, cg):
    w1f = w1f_ref[...]                        # (C, C) bf16, BN scale folded in
    w2f = w2f_ref[...]                        # (C, C) bf16, BN scale folded in
    t1 = t1_ref[...]                          # (C, 1) f32 shift (bias+BN folded)
    t2 = t2_ref[...]                          # (C, 1) f32 shift
    g_blk, c, hw = x_ref.shape

    for g in range(g_blk):                    # small static unroll (batches per step)
        # seq1: block-diagonal grouped 1x1 conv (+BN) + ReLU.  Cast to bf16 in-kernel.
        x = x_ref[g].astype(jnp.bfloat16)                               # (C, HW)
        y1 = jnp.dot(w1f, x, preferred_element_type=jnp.float32)       # (C, HW) f32
        y1 = jnp.maximum(y1 + t1, 0.0)

        # Per-group attention via sublane reshape-reduce (no indicator matmuls):
        #   att_g(s) = <a_n, y1_g(:,s)> / max(||y1_g(:,s)||_2, 1e-12)
        # cg == 8 at the test size -> the sublane split is tile-preserving.
        y1r = y1.reshape(head, cg, hw)                                  # (head,cg,HW)
        a_n = a_ref[g]                                                  # (cg, 1) f32
        att = jnp.sum(a_n[None, :, :] * y1r, axis=1, keepdims=True)    # (head,1,HW)
        nrm = jnp.sum(y1r * y1r, axis=1, keepdims=True)                 # (head,1,HW)
        att = att * jax.lax.rsqrt(jnp.maximum(nrm, 1e-24))              # EUP rsqrt
        z = (y1r * att).reshape(c, hw).astype(jnp.bfloat16)             # gated (C,HW)

        # seq2: 1x1 conv (+BN) + ReLU.
        out = jnp.dot(w2f, z, preferred_element_type=jnp.float32)
        out = jnp.maximum(out + t2, 0.0)
        o_ref[g] = out.astype(o_ref.dtype)


def avga_forward(x_nchw, a, params, head, *, batch_block=1, out_dtype=jnp.bfloat16):
    b, c, h, w = x_nchw.shape
    hw = h * w
    cg = c // head
    (w1, s1, t1, wfc1_t, bfc1, wfc2_t, bfc2, w2, s2, t2) = params
    f32 = jnp.float32

    # ---- prologue (plain JAX, tiny, once for all batches) ----
    # fc: Linear(C,C) -> Linear(C,C//head) -> ReLU, then L2-normalize.
    a = a.astype(f32)
    af = jnp.maximum((a @ wfc1_t + bfc1) @ wfc2_t + bfc2, 0.0)                # (B, CG)
    a_n = af / jnp.maximum(jnp.linalg.norm(af, axis=1, keepdims=True), 1e-12)
    a_n = a_n.reshape(b, cg, 1)

    eye = jnp.eye(head, dtype=f32)
    # Block-diagonal grouped-conv weight with BN scale folded in.
    w1bd = jnp.einsum('gh,gij->gihj', eye, w1).reshape(c, c)
    w1f = (s1 * w1bd).astype(jnp.bfloat16)                                    # (C, C)
    w2f = (s2 * w2).astype(jnp.bfloat16)                                      # (C, C)

    # x stays f32 (cast happens inside the kernel).  Pad spatial dim to a multiple
    # of 128 lanes so output stores stay unmasked / lane-dense.
    x = x_nchw.reshape(b, c, hw)
    hw_pad = ((hw + 127) // 128) * 128
    if hw_pad != hw:
        x = jnp.pad(x, ((0, 0), (0, 0), (0, hw_pad - hw)))

    gb = max(1, min(batch_block, b))
    if b % gb != 0:
        gb = 1                                   # fall back to one batch per step
    grid = (b // gb,)

    def full(arr):
        return pl.BlockSpec(arr.shape, lambda i, n=arr.ndim: (0,) * n)

    kernel = functools.partial(_avga_kernel, head=head, cg=cg)
    out = pl.pallas_call(
        kernel,
        out_shape=jax.ShapeDtypeStruct((b, c, hw_pad), out_dtype),
        grid=grid,
        in_specs=[
            pl.BlockSpec((gb, cg, 1), lambda i: (i, 0, 0)),       # a_n per batch
            pl.BlockSpec((gb, c, hw_pad), lambda i: (i, 0, 0)),   # x slab (f32)
            full(w1f), full(t1), full(w2f), full(t2),
        ],
        out_specs=pl.BlockSpec((gb, c, hw_pad), lambda i: (i, 0, 0)),
        compiler_params=pltpu.CompilerParams(dimension_semantics=("parallel",)),
    )(a_n, x, w1f, t1, w2f, t2)
    if hw_pad != hw:
        out = out[:, :, :hw]
    return out.reshape(b, c, h, w)


def init_params(key, c, head):
    """Deterministic synthetic parameters; BN (eval mode) folded into scale/shift."""
    cg = c // head
    eps = 1e-5
    ks = jax.random.split(key, 18)

    def rnd(k, shape, scale=0.1):
        return scale * jax.random.normal(k, shape, dtype=jnp.float32)

    # seq1: grouped 1x1 conv (C, C//head, 1, 1) -> (head, CG_out, CG_in), bias (C,)
    w1 = rnd(ks[0], (head, cg, cg))
    b1 = rnd(ks[1], (c,))
    g1 = 1.0 + rnd(ks[2], (c,))
    be1 = rnd(ks[3], (c,))
    m1 = rnd(ks[4], (c,))
    v1 = jnp.abs(rnd(ks[5], (c,))) + 0.5
    s1 = g1 / jnp.sqrt(v1 + eps)
    t1 = (b1 - m1) * s1 + be1

    # fc: Linear(C, C), Linear(C, C//head)  (stored pre-transposed: y = x @ W.T + b)
    wfc1_t = rnd(ks[6], (c, c))
    bfc1 = rnd(ks[7], (1, c))
    wfc2_t = rnd(ks[8], (c, cg))
    bfc2 = rnd(ks[9], (1, cg))

    # seq2: 1x1 conv (C, C, 1, 1) -> (C, C), bias (C,)
    w2 = rnd(ks[10], (c, c))
    b2 = rnd(ks[11], (c,))
    g2 = 1.0 + rnd(ks[12], (c,))
    be2 = rnd(ks[13], (c,))
    m2 = rnd(ks[14], (c,))
    v2 = jnp.abs(rnd(ks[15], (c,))) + 0.5
    s2 = g2 / jnp.sqrt(v2 + eps)
    t2 = (b2 - m2) * s2 + be2

    return (w1, s1.reshape(c, 1), t1.reshape(c, 1),
            wfc1_t, bfc1, wfc2_t, bfc2,
            w2, s2.reshape(c, 1), t2.reshape(c, 1))


def avga_ref(x_nchw, a, params, head):
    """Pure-JAX (f32) reference mirroring the PyTorch forward."""
    w1, s1, t1, wfc1_t, bfc1, wfc2_t, bfc2, w2, s2, t2 = params
    b, c, h, w = x_nchw.shape
    cg = c // head
    hw = h * w
    x = x_nchw.reshape(b, c, hw)

    # seq1 (grouped 1x1 conv + BN + ReLU)
    xg = x.reshape(b, head, cg, hw)
    y1 = jnp.einsum('gij,bgjs->bgis', w1, xg).reshape(b, c, hw)
    y1 = jnp.maximum(y1 * s1[None] + t1[None], 0.0)

    # fc + vec2mat + normalize
    af = jnp.maximum((a @ wfc1_t + bfc1) @ wfc2_t + bfc2, 0.0)               # (b, cg)
    a_n = af / jnp.maximum(jnp.linalg.norm(af, axis=1, keepdims=True), 1e-12)

    y1g = y1.reshape(b, head, cg, hw)
    nrm = jnp.sqrt(jnp.sum(y1g * y1g, axis=2, keepdims=True))
    y1n = y1g / jnp.maximum(nrm, 1e-12)
    att = jnp.einsum('bc,bgcs->bgs', a_n, y1n)[:, :, None, :]                # (b, head, 1, hw)
    z = (att * y1g).reshape(b, c, hw)

    out = jnp.einsum('ij,bjs->bis', w2, z)
    out = jnp.maximum(out * s2[None] + t2[None], 0.0)
    return out.reshape(b, c, h, w)


if __name__ == "__main__":
    key = jax.random.PRNGKey(0)
    b, c, h, w, head = 2, 32, 16, 16, 4
    kx, ka, kp, kx2, ka2 = jax.random.split(key, 5)
    x = jax.random.normal(kx, (b, c, h, w), dtype=jnp.float32)
    a = jax.random.normal(ka, (b, c), dtype=jnp.float32)
    params = init_params(kp, c, head)

    ref = avga_ref(x, a, params, head)

    # One batch per step: 2 "parallel" grid steps (keeps both v7x TensorCores busy).
    out1 = jax.block_until_ready(avga_forward(x, a, params, head, batch_block=1))
    assert out1.shape == (b, c, h, w)
    np.testing.assert_allclose(np.asarray(out1, dtype=np.float32), np.asarray(ref),
                               rtol=2e-2, atol=2e-2)

    # Amortized path: both batches in a single grid step (batch_block=2).
    out2 = jax.block_until_ready(avga_forward(x, a, params, head, batch_block=2))
    np.testing.assert_allclose(np.asarray(out2, dtype=np.float32), np.asarray(ref),
                               rtol=2e-2, atol=2e-2)

    # Non-multiple-of-128 spatial size (14x14=196) exercises the lane-padding path.
    x3 = jax.random.normal(kx2, (b, c, 14, 14), dtype=jnp.float32)
    a3 = jax.random.normal(ka2, (b, c), dtype=jnp.float32)
    out3 = jax.block_until_ready(avga_forward(x3, a3, params, head))
    ref3 = avga_ref(x3, a3, params, head)
    np.testing.assert_allclose(np.asarray(out3, dtype=np.float32), np.asarray(ref3),
                               rtol=2e-2, atol=2e-2)

    print("KERNEL_OK")
</pallas_src>

<mosaic_0001>
module attributes {stable_mosaic.version = 11 : i64} {
  func.func @_avga_kernel(%arg0: i32, %arg1: memref<1x8x1xf32, #tpu.memory_space<vmem>>, %arg2: memref<1x32x256xf32, #tpu.memory_space<vmem>>, %arg3: memref<32x32xbf16, #tpu.memory_space<vmem>>, %arg4: memref<32x1xf32, #tpu.memory_space<vmem>>, %arg5: memref<32x32xbf16, #tpu.memory_space<vmem>>, %arg6: memref<32x1xf32, #tpu.memory_space<vmem>>, %arg7: memref<1x32x256xbf16, #tpu.memory_space<vmem>>) attributes {dimension_semantics = [#tpu.dimension_semantics<parallel>], iteration_bounds = array<i64: 2>, scalar_prefetch = 0 : i64, scratch_operands = 0 : i64, tpu.core_type = #tpu.core_type<tc>, window_params = [{transform_indices = @transform_0, window_bounds = array<i64: 1, 8, 1>}, {transform_indices = @transform_1, window_bounds = array<i64: 1, 32, 256>}, {pipeline_mode = #tpu.pipeline_mode<synchronous>, transform_indices = @transform_2, window_bounds = array<i64: 32, 32>}, {pipeline_mode = #tpu.pipeline_mode<synchronous>, transform_indices = @transform_3, window_bounds = array<i64: 32, 1>}, {pipeline_mode = #tpu.pipeline_mode<synchronous>, transform_indices = @transform_4, window_bounds = array<i64: 32, 32>}, {pipeline_mode = #tpu.pipeline_mode<synchronous>, transform_indices = @transform_5, window_bounds = array<i64: 32, 1>}, {transform_indices = @transform_6, window_bounds = array<i64: 1, 32, 256>}]} {
    %c0 = arith.constant 0 : index
    %c0_0 = arith.constant 0 : index
    %0 = vector.load %arg3[%c0, %c0_0] : memref<32x32xbf16, #tpu.memory_space<vmem>>, vector<32x32xbf16>
    %c0_1 = arith.constant 0 : index
    %c0_2 = arith.constant 0 : index
    %1 = vector.load %arg5[%c0_1, %c0_2] : memref<32x32xbf16, #tpu.memory_space<vmem>>, vector<32x32xbf16>
    %c0_3 = arith.constant 0 : index
    %c0_4 = arith.constant 0 : index
    %2 = vector.load %arg4[%c0_3, %c0_4] : memref<32x1xf32, #tpu.memory_space<vmem>>, vector<32x1xf32>
    %c0_5 = arith.constant 0 : index
    %c0_6 = arith.constant 0 : index
    %3 = vector.load %arg6[%c0_5, %c0_6] : memref<32x1xf32, #tpu.memory_space<vmem>>, vector<32x1xf32>
    %c0_7 = arith.constant 0 : index
    %c0_8 = arith.constant 0 : index
    %c0_9 = arith.constant 0 : index
    %4 = vector.load %arg2[%c0_7, %c0_8, %c0_9] : memref<1x32x256xf32, #tpu.memory_space<vmem>>, vector<1x32x256xf32>
    %5 = vector.shape_cast %4 : vector<1x32x256xf32> to vector<32x256xf32>
    %6 = arith.truncf %5 : vector<32x256xf32> to vector<32x256xbf16>
    %cst = arith.constant dense<0.000000e+00> : vector<32x256xf32>
    %7 = tpu.matmul %0, %6, %cst {dimension_numbers = #tpu.dot_dimension_numbers<[1], [0], [0], [1], [0, 0, 1, 1], [], []>} : vector<32x32xbf16>, vector<32x256xbf16>, vector<32x256xf32> -> vector<32x256xf32>
    %8 = vector.broadcast %2 : vector<32x1xf32> to vector<32x256xf32>
    %9 = arith.addf %7, %8 : vector<32x256xf32>
    %cst_10 = arith.constant 0.000000e+00 : f32
    %10 = vector.broadcast %cst_10 : f32 to vector<32x256xf32>
    %11 = arith.maximumf %9, %10 : vector<32x256xf32>
    %12 = vector.shape_cast %11 : vector<32x256xf32> to vector<4x8x256xf32>
    %c0_11 = arith.constant 0 : index
    %c0_12 = arith.constant 0 : index
    %c0_13 = arith.constant 0 : index
    %13 = vector.load %arg1[%c0_11, %c0_12, %c0_13] : memref<1x8x1xf32, #tpu.memory_space<vmem>>, vector<1x8x1xf32>
    %14 = vector.shape_cast %13 : vector<1x8x1xf32> to vector<8x1xf32>
    %15 = vector.shape_cast %14 : vector<8x1xf32> to vector<1x8x1xf32>
    %16 = vector.broadcast %15 : vector<1x8x1xf32> to vector<4x8x256xf32>
    %17 = arith.mulf %16, %12 : vector<4x8x256xf32>
    %cst_14 = arith.constant dense<0.000000e+00> : vector<4x256xf32>
    %18 = vector.multi_reduction <add>, %17, %cst_14 [1] : vector<4x8x256xf32> to vector<4x256xf32>
    %19 = vector.shape_cast %18 : vector<4x256xf32> to vector<4x1x256xf32>
    %20 = arith.mulf %12, %12 : vector<4x8x256xf32>
    %cst_15 = arith.constant dense<0.000000e+00> : vector<4x256xf32>
    %21 = vector.multi_reduction <add>, %20, %cst_15 [1] : vector<4x8x256xf32> to vector<4x256xf32>
    %22 = vector.shape_cast %21 : vector<4x256xf32> to vector<4x1x256xf32>
    %cst_16 = arith.constant 1.000000e-24 : f32
    %23 = vector.broadcast %cst_16 : f32 to vector<4x1x256xf32>
    %24 = arith.maximumf %22, %23 : vector<4x1x256xf32>
    %25 = math.rsqrt %24 : vector<4x1x256xf32>
    %26 = arith.mulf %19, %25 : vector<4x1x256xf32>
    %27 = vector.broadcast %26 : vector<4x1x256xf32> to vector<4x8x256xf32>
    %28 = arith.mulf %12, %27 : vector<4x8x256xf32>
    %29 = vector.shape_cast %28 : vector<4x8x256xf32> to vector<32x256xf32>
    %30 = arith.truncf %29 : vector<32x256xf32> to vector<32x256xbf16>
    %cst_17 = arith.constant dense<0.000000e+00> : vector<32x256xf32>
    %31 = tpu.matmul %1, %30, %cst_17 {dimension_numbers = #tpu.dot_dimension_numbers<[1], [0], [0], [1], [0, 0, 1, 1], [], []>} : vector<32x32xbf16>, vector<32x256xbf16>, vector<32x256xf32> -> vector<32x256xf32>
    %32 = vector.broadcast %3 : vector<32x1xf32> to vector<32x256xf32>
    %33 = arith.addf %31, %32 : vector<32x256xf32>
    %cst_18 = arith.constant 0.000000e+00 : f32
    %34 = vector.broadcast %cst_18 : f32 to vector<32x256xf32>
    %35 = arith.maximumf %33, %34 : vector<32x256xf32>
    %36 = arith.truncf %35 : vector<32x256xf32> to vector<32x256xbf16>
    %c0_19 = arith.constant 0 : index
    %c0_20 = arith.constant 0 : index
    %c0_21 = arith.constant 0 : index
    %37 = vector.load %arg7[%c0_19, %c0_20, %c0_21] : memref<1x32x256xbf16, #tpu.memory_space<vmem>>, vector<1x32x256xbf16>
    %38 = vector.shape_cast %37 : vector<1x32x256xbf16> to vector<32x256xbf16>
    %39 = vector.shape_cast %36 : vector<32x256xbf16> to vector<1x32x256xbf16>
    tpu.vector_store %arg7[%c0_19, %c0_20, %c0_21], %39 {strides = array<i32>} : memref<1x32x256xbf16, #tpu.memory_space<vmem>>, vector<1x32x256xbf16>,
    return
  }
  func.func @transform_0(%arg0: i32) -> (i32, i32, i32) {
    %c0_i32 = arith.constant 0 : i32
    %c0_i32_0 = arith.constant 0 : i32
    %c0_i32_1 = arith.constant 0 : i32
    return %arg0, %c0_i32, %c0_i32_0 : i32, i32, i32
  }
  func.func @transform_1(%arg0: i32) -> (i32, i32, i32) {
    %c0_i32 = arith.constant 0 : i32
    %c0_i32_0 = arith.constant 0 : i32
    %c0_i32_1 = arith.constant 0 : i32
    return %arg0, %c0_i32, %c0_i32_0 : i32, i32, i32
  }
  func.func @transform_2(%arg0: i32) -> (i32, i32) {
    %c0_i32 = arith.constant 0 : i32
    %c0_i32_0 = arith.constant 0 : i32
    %c0_i32_1 = arith.constant 0 : i32
    return %c0_i32, %c0_i32_0 : i32, i32
  }
  func.func @transform_3(%arg0: i32) -> (i32, i32) {
    %c0_i32 = arith.constant 0 : i32
    %c0_i32_0 = arith.constant 0 : i32
    %c0_i32_1 = arith.constant 0 : i32
    return %c0_i32, %c0_i32_0 : i32, i32
  }
  func.func @transform_4(%arg0: i32) -> (i32, i32) {
    %c0_i32 = arith.constant 0 : i32
    %c0_i32_0 = arith.constant 0 : i32
    %c0_i32_1 = arith.constant 0 : i32
    return %c0_i32, %c0_i32_0 : i32, i32
  }
  func.func @transform_5(%arg0: i32) -> (i32, i32) {
    %c0_i32 = arith.constant 0 : i32
    %c0_i32_0 = arith.constant 0 : i32
    %c0_i32_1 = arith.constant 0 : i32
    return %c0_i32, %c0_i32_0 : i32, i32
  }
  func.func @transform_6(%arg0: i32) -> (i32, i32, i32) {
    %c0_i32 = arith.constant 0 : i32
    %c0_i32_0 = arith.constant 0 : i32
    %c0_i32_1 = arith.constant 0 : i32
    return %arg0, %c0_i32, %c0_i32_0 : i32, i32, i32
  }
}

</mosaic_0001>

<llo_original>
// kernel: tpu_custom_call.1
$region0: #{tpu_custom_call.1}
  #allocation0 [shape = 'u32[]', space=smem, size = 0x4, offset = 0x4, fixed_abs, tag = 'smem constant byte address 0x4 - core index']
  #allocation1 [shape = 'u32[144,128]{1,0:T(1,128)}', space=vmem, size = 0x12000, scoped, tag = 'internal scratch']
  %s0 = inlined_call_operand.vmem [shape: f32[2,8,1], index: 0, kind: input, shape index: {}]
  %s1 = inlined_call_operand.hbm [shape: f32[2,32,256], index: 1, kind: input, shape index: {}]
  %s2 = inlined_call_operand.vmem [shape: bf16[32,32], index: 2, kind: input, shape index: {}]
  %s3 = inlined_call_operand.vmem [shape: f32[32,1], index: 3, kind: input, shape index: {}]
  %s4 = inlined_call_operand.vmem [shape: bf16[32,32], index: 4, kind: input, shape index: {}]
  %s5 = inlined_call_operand.vmem [shape: f32[32,1], index: 5, kind: input, shape index: {}]
  %s6 = inlined_call_operand.hbm [shape: bf16[2,32,256], index: 6, kind: output, shape index: {}]
  %s7 = sld [smem:[#allocation0]]
  $region61: #{tpu_custom_call.1} parent=0
    _
  %s9 = ssub.s32 1, %s7
  %s10 = scalar_select 0, %s9, %s7
  $region1: #{tpu_custom_call.1} parent=0
    #allocation2 [shape = 'u8[65536]{0}', space=vmem, size = 0x10000, scoped, tag = 'input window, operand 1']
    #allocation3 [shape = 's32[2]{0}', space=sflag, size = 0x8, scoped, tag = 'scoped memory for tpu_custom_call.1']
    #allocation4 [shape = 's32[2]{0}', space=sflag, size = 0x8, scoped, tag = 'scoped memory for tpu_custom_call.1']
    #allocation5 [shape = 'u8[32768]{0}', space=vmem, size = 0x8000, scoped, tag = 'output window, operand 0']
    %11 = vsyncpa [#allocation3], 0
    %s12 = scalar_lea.sflag [#allocation3], 1
    %13 = vsyncpa %s12, 0
    %14 = vsyncpa [#allocation4], 0
    %s15 = scalar_lea.sflag [#allocation4], 1
    %16 = vsyncpa %s15, 0
    loop: start=0, step=1, limit=4
    $region2: #{tpu_custom_call.1} parent=1 // loop_pre_header
      _
    $region3: #{tpu_custom_call.1} parent=1 // loop_header
      %s18 = sphi 0, %s22
      %p19 = scmp.ge.s32.totalorder %s18, 4
      %s28 = sphi 0, %s30
      %s31 = sphi 0, %s28
      %s32 = sphi 0, %s31
      %s48 = sphi 0, %s32
      %s54 = sphi 0, %s56
      %s57 = sphi 0, %s54
      %s58 = sphi 0, %s57
      %s74 = sphi 0, %s58
      %s78 = sphi 0, %s78
      %s80 = sphi 0, %s78
      %s81 = sphi 0, %s80
      %s95 = sphi 0, %s81
      %s99 = sphi 0, %s99
      %s101 = sphi 0, %s99
      %s102 = sphi 0, %s101
      %s116 = sphi 0, %s102
      %s120 = sphi 0, %s120
      %s122 = sphi 0, %s120
      %s123 = sphi 0, %s122
      %s137 = sphi 0, %s123
      %s141 = sphi 0, %s141
      %s143 = sphi 0, %s141
      %s144 = sphi 0, %s143
      %s158 = sphi 0, %s144
      %s164 = sphi 0, %s166
      %s167 = sphi 0, %s164
      %s168 = sphi 0, %s167
      %s184 = sphi 0, %s168
    $region4: #{tpu_custom_call.1} parent=1 // loop_header_branch
      %21 = sbr.rel (%p19) target = $region8
    $region5: #{tpu_custom_call.1} parent=1 // loop_body
      %s23 = ssub.s32 %s18, 1
      %s24 = ssub.s32 %s18, 2
      %s25 = sadd.s32 %s18, 1
      %s26 = ssub.s32 %s18, %s25
      %p27 = scmp.eq.s32.totalorder %s26, 0
      %s29 = sadd.s32 %s28, 1
      %s30 = scalar_select %p27, %s28, %s29
      %p33 = pneg %p27
      %p34 = scmp.eq.s32.totalorder %s18, 1
      %p35 = por %p33, %p34
      %p36 = scmp.ne.s32.totalorder %s28, %s31
      %p37 = scmp.eq.s32.totalorder %s18, 0
      %p38 = por %p36, %p37
      %p39 = scmp.ne.s32.totalorder %s28, %s31
      %p40 = scmp.eq.s32.totalorder %s23, 1
      %p41 = por %p39, %p40
      %p42 = scmp.ne.s32.totalorder %s31, %s32
      %p43 = scmp.eq.s32.totalorder %s23, 0
      %p44 = por %p42, %p43
      %p45 = scmp.ne.s32.totalorder %s31, %s32
      %p46 = scmp.eq.s32.totalorder %s24, 1
      %p47 = por %p45, %p46
      %p49 = scmp.ne.s32.totalorder %s32, %s48
      %p50 = scmp.eq.s32.totalorder %s24, 0
      %p51 = por %p49, %p50
      %s52 = ssub.s32 %s18, %s25
      %p53 = scmp.eq.s32.totalorder %s52, 0
      %s55 = sadd.s32 %s54, 1
      %s56 = scalar_select %p53, %s54, %s55
      %p59 = pneg %p53
      %p60 = scmp.eq.s32.totalorder %s18, 1
      %p61 = por %p59, %p60
      %p62 = scmp.ne.s32.totalorder %s54, %s57
      %p63 = scmp.eq.s32.totalorder %s18, 0
      %p64 = por %p62, %p63
      %p65 = scmp.ne.s32.totalorder %s54, %s57
      %p66 = scmp.eq.s32.totalorder %s23, 1
      %p67 = por %p65, %p66
      %p68 = scmp.ne.s32.totalorder %s57, %s58
      %p69 = scmp.eq.s32.totalorder %s23, 0
      %p70 = por %p68, %p69
      %p71 = scmp.ne.s32.totalorder %s57, %s58
      %p72 = scmp.eq.s32.totalorder %s24, 1
      %p73 = por %p71, %p72
      %p75 = scmp.ne.s32.totalorder %s58, %s74
      %p76 = scmp.eq.s32.totalorder %s24, 0
      %p77 = por %p75, %p76
      %s79 = sadd.s32 %s78, 1
      %p82 = scmp.eq.s32.totalorder %s18, 1
      %p83 = scmp.ne.s32.totalorder %s78, %s80
      %p84 = scmp.eq.s32.totalorder %s18, 0
      %p85 = por %p83, %p84
      %p86 = scmp.ne.s32.totalorder %s78, %s80
      %p87 = scmp.eq.s32.totalorder %s23, 1
      %p88 = por %p86, %p87
      %p89 = scmp.ne.s32.totalorder %s80, %s81
      %p90 = scmp.eq.s32.totalorder %s23, 0
      %p91 = por %p89, %p90
      %p92 = scmp.ne.s32.totalorder %s80, %s81
      %p93 = scmp.eq.s32.totalorder %s24, 1
      %p94 = por %p92, %p93
      %p96 = scmp.ne.s32.totalorder %s81, %s95
      %p97 = scmp.eq.s32.totalorder %s24, 0
      %p98 = por %p96, %p97
      %s100 = sadd.s32 %s99, 1
      %p103 = scmp.eq.s32.totalorder %s18, 1
      %p104 = scmp.ne.s32.totalorder %s99, %s101
      %p105 = scmp.eq.s32.totalorder %s18, 0
      %p106 = por %p104, %p105
      %p107 = scmp.ne.s32.totalorder %s99, %s101
      %p108 = scmp.eq.s32.totalorder %s23, 1
      %p109 = por %p107, %p108
      %p110 = scmp.ne.s32.totalorder %s101, %s102
      %p111 = scmp.eq.s32.totalorder %s23, 0
      %p112 = por %p110, %p111
      %p113 = scmp.ne.s32.totalorder %s101, %s102
      %p114 = scmp.eq.s32.totalorder %s24, 1
      %p115 = por %p113, %p114
      %p117 = scmp.ne.s32.totalorder %s102, %s116
      %p118 = scmp.eq.s32.totalorder %s24, 0
      %p119 = por %p117, %p118
      %s121 = sadd.s32 %s120, 1
      %p124 = scmp.eq.s32.totalorder %s18, 1
      %p125 = scmp.ne.s32.totalorder %s120, %s122
      %p126 = scmp.eq.s32.totalorder %s18, 0
      %p127 = por %p125, %p126
      %p128 = scmp.ne.s32.totalorder %s120, %s122
      %p129 = scmp.eq.s32.totalorder %s23, 1
      %p130 = por %p128, %p129
      %p131 = scmp.ne.s32.totalorder %s122, %s123
      %p132 = scmp.eq.s32.totalorder %s23, 0
      %p133 = por %p131, %p132
      %p134 = scmp.ne.s32.totalorder %s122, %s123
      %p135 = scmp.eq.s32.totalorder %s24, 1
      %p136 = por %p134, %p135
      %p138 = scmp.ne.s32.totalorder %s123, %s137
      %p139 = scmp.eq.s32.totalorder %s24, 0
      %p140 = por %p138, %p139
      %s142 = sadd.s32 %s141, 1
      %p145 = scmp.eq.s32.totalorder %s18, 1
      %p146 = scmp.ne.s32.totalorder %s141, %s143
      %p147 = scmp.eq.s32.totalorder %s18, 0
      %p148 = por %p146, %p147
      %p149 = scmp.ne.s32.totalorder %s141, %s143
      %p150 = scmp.eq.s32.totalorder %s23, 1
      %p151 = por %p149, %p150
      %p152 = scmp.ne.s32.totalorder %s143, %s144
      %p153 = scmp.eq.s32.totalorder %s23, 0
      %p154 = por %p152, %p153
      %p155 = scmp.ne.s32.totalorder %s143, %s144
      %p156 = scmp.eq.s32.totalorder %s24, 1
      %p157 = por %p155, %p156
      %p159 = scmp.ne.s32.totalorder %s144, %s158
      %p160 = scmp.eq.s32.totalorder %s24, 0
      %p161 = por %p159, %p160
      %s162 = ssub.s32 %s18, %s25
      %p163 = scmp.eq.s32.totalorder %s162, 0
      %s165 = sadd.s32 %s164, 1
      %s166 = scalar_select %p163, %s164, %s165
      %p169 = pneg %p163
      %p170 = scmp.eq.s32.totalorder %s18, 1
      %p171 = por %p169, %p170
      %p172 = scmp.ne.s32.totalorder %s164, %s167
      %p173 = scmp.eq.s32.totalorder %s18, 0
      %p174 = por %p172, %p173
      %p175 = scmp.ne.s32.totalorder %s164, %s167
      %p176 = scmp.eq.s32.totalorder %s23, 1
      %p177 = por %p175, %p176
      %p178 = scmp.ne.s32.totalorder %s167, %s168
      %p179 = scmp.eq.s32.totalorder %s23, 0
      %p180 = por %p178, %p179
      %p181 = scmp.ne.s32.totalorder %s167, %s168
      %p182 = scmp.eq.s32.totalorder %s24, 1
      %p183 = por %p181, %p182
      %p185 = scmp.ne.s32.totalorder %s168, %s184
      %p186 = scmp.eq.s32.totalorder %s24, 0
      %p187 = por %p185, %p186
      %p188 = scmp.le.s32.totalorder 1, %s18
      %p189 = scmp.lt.s32.totalorder %s18, 3
      %p190 = pnand %p188, %p189
      %p191 = pneg %p190
      // Predicated region
      $region9: #{tpu_custom_call.1} parent=5 // pred_check
        _
      $region10: #{tpu_custom_call.1} parent=5 // pred_check_branch
        %193 = sbr.rel (%p190) target = $region12
      $region11: #{tpu_custom_call.1} parent=5 // pred_region
        %s194 = ssub.s32 %s18, 1
        // Predicated region
        $region13: #{tpu_custom_call.1} parent=11 // pred_check
          %p195 = pneg %p91
        $region14: #{tpu_custom_call.1} parent=11 // pred_check_branch
          %197 = sbr.rel (%p195) target = $region16
        $region15: #{tpu_custom_call.1} parent=11 // pred_region
          _
        $region16: #{tpu_custom_call.1} parent=11 // pred_fallthru
          _
        // Predicated region
        $region17: #{tpu_custom_call.1} parent=11 // pred_check
          %p198 = pneg %p112
        $region18: #{tpu_custom_call.1} parent=11 // pred_check_branch
          %200 = sbr.rel (%p198) target = $region20
        $region19: #{tpu_custom_call.1} parent=11 // pred_region
          _
        $region20: #{tpu_custom_call.1} parent=11 // pred_fallthru
          _
        // Predicated region
        $region21: #{tpu_custom_call.1} parent=11 // pred_check
          %p201 = pneg %p133
        $region22: #{tpu_custom_call.1} parent=11 // pred_check_branch
          %203 = sbr.rel (%p201) target = $region24
        $region23: #{tpu_custom_call.1} parent=11 // pred_region
          _
        $region24: #{tpu_custom_call.1} parent=11 // pred_fallthru
          _
        // Predicated region
        $region25: #{tpu_custom_call.1} parent=11 // pred_check
          %p204 = pneg %p154
        $region26: #{tpu_custom_call.1} parent=11 // pred_check_branch
          %206 = sbr.rel (%p204) target = $region28
        $region27: #{tpu_custom_call.1} parent=11 // pred_region
          _
        $region28: #{tpu_custom_call.1} parent=11 // pred_fallthru
          _
      $region12: #{tpu_custom_call.1} parent=5 // pred_fallthru
        _
      %p207 = scmp.lt.s32.totalorder %s18, 2
      // Predicated region
      $region29: #{tpu_custom_call.1} parent=5 // pred_check
        %p208 = pneg %p207
      $region30: #{tpu_custom_call.1} parent=5 // pred_check_branch
        %210 = sbr.rel (%p208) target = $region32
      $region31: #{tpu_custom_call.1} parent=5 // pred_region
        // Predicated region
        $region33: #{tpu_custom_call.1} parent=31 // pred_check
          %p211 = pneg %p38
        $region34: #{tpu_custom_call.1} parent=31 // pred_check_branch
          %213 = sbr.rel (%p211) target = $region36
        $region35: #{tpu_custom_call.1} parent=31 // pred_region
          %p214 = scmp.lt.s32.totalorder %s18, 1
          %s215 = scalar_select %p214, %s18, 1
          %s216 = smul.addr %s215, 8
          %s217 = scalar_lea.vmem %s0, %s216
        $region36: #{tpu_custom_call.1} parent=31 // pred_fallthru
          _
        // Predicated region
        $region37: #{tpu_custom_call.1} parent=31 // pred_check
          %p218 = pneg %p64
        $region38: #{tpu_custom_call.1} parent=31 // pred_check_branch
          %220 = sbr.rel (%p218) target = $region40
        $region39: #{tpu_custom_call.1} parent=31 // pred_region
          %s221 = sand.u32 %s54, 1
          %s222 = scalar_lea.sflag [#allocation3], %s221
          %s223 = sand.u32 %s54, 1
          %s224 = smul.addr %s223, 64
          %s225 = scalar_lea.vmem [#allocation2], %s224
          %s227 = ssub.s32 1024, 1024
          %228 = vsyncadd %s222, %s227
          %s229 = smul.addr %s18, 8
          %s230 = smul.addr %s229, 128
          %s231 = scalar_lea.hbm %s1, %s230
          %s232 = sshll.u32 %s225, 4
          %s233 = int_to_ptr.vmem [resolvable:$true] %s232
          %238 = dma.hbm_to_vmem [thread:$0]  %s231, 1024, %s233, %s222, 256, 256, 16
        $region40: #{tpu_custom_call.1} parent=31 // pred_fallthru
          _
      $region32: #{tpu_custom_call.1} parent=5 // pred_fallthru
        _
      %p239 = scmp.le.s32.totalorder 1, %s18
      %p240 = scmp.lt.s32.totalorder %s18, 3
      %p241 = pnand %p239, %p240
      %p242 = pneg %p241
      // Predicated region
      $region41: #{tpu_custom_call.1} parent=5 // pred_check
        _
      $region42: #{tpu_custom_call.1} parent=5 // pred_check_branch
        %244 = sbr.rel (%p241) target = $region44
      $region43: #{tpu_custom_call.1} parent=5 // pred_region
        %s245 = ssub.s32 %s18, 1
        %s246 = sand.u32 %s57, 1
        %s247 = scalar_lea.sflag [#allocation3], %s246
        %s248 = sand.u32 %s57, 1
        %s249 = smul.addr %s248, 64
        %s250 = scalar_lea.vmem [#allocation2], %s249
        // Predicated region
        $region45: #{tpu_custom_call.1} parent=43 // pred_check
          %p251 = pneg %p70
        $region46: #{tpu_custom_call.1} parent=43 // pred_check_branch
          %253 = sbr.rel (%p251) target = $region48
        $region47: #{tpu_custom_call.1} parent=43 // pred_region
          %254 = dma.done %s247, 1024
        $region48: #{tpu_custom_call.1} parent=43 // pred_fallthru
          _
        %p255 = scmp.lt.s32.totalorder %s23, 1
        %s256 = scalar_select %p255, %s23, 1
        %s257 = smul.addr %s256, 8
        %s258 = scalar_lea.vmem %s0, %s257
        %p259 = pneg %p44
        %p260 = pneg %p41
        %s261 = sand.u32 %s57, 1
        %s262 = scalar_lea.sflag [#allocation3], %s261
        %s263 = sand.u32 %s57, 1
        %s264 = smul.addr %s263, 64
        %s265 = scalar_lea.vmem [#allocation2], %s264
        %p266 = pneg %p70
        %p267 = pneg %p67
        %p268 = pneg %p91
        %p269 = pneg %p88
        %p270 = pneg %p112
        %p271 = pneg %p109
        %p272 = pneg %p133
        %p273 = pneg %p130
        %p274 = pneg %p154
        %p275 = pneg %p151
        %p276 = pneg %p180
        %p277 = pneg %p177
        %s278 = sand.u32 %s167, 1
        %s279 = scalar_lea.sflag [#allocation4], %s278
        %s280 = sand.u32 %s167, 1
        %s281 = smul.addr %s280, 32
        %s282 = scalar_lea.vmem [#allocation5], %s281
        %p283 = scmp.lt.s32.totalorder %s23, 1
        %s284 = scalar_select %p283, %s23, 1
        %s285 = smul.addr %s284, 8
        %s286 = scalar_lea.vmem %s0, %s285
        %v288 = vld [vmem:[%s2] sm:$0xf]
        %v289 = vld [vmem:[%s2 + $0x4] sm:$0xf]
        %v290 = vld [vmem:[%s2 + $0x8] sm:$0xf]
        %v291 = vld [vmem:[%s2 + $0xc] sm:$0xf]
        %v292 = vld [vmem:[%s4] sm:$0xf]
        %v293 = vld [vmem:[%s4 + $0x4] sm:$0xf]
        %v294 = vld [vmem:[%s4 + $0x8] sm:$0xf]
        %v295 = vld [vmem:[%s4 + $0xc] sm:$0xf]
        %v296 = vld [vmem:[%s3] sm:$0xff]
        %v297 = vld [vmem:[%s3 + $0x8] sm:$0xff]
        %v298 = vld [vmem:[%s3 + $0x10] sm:$0xff]
        %v299 = vld [vmem:[%s3 + $0x18] sm:$0xff]
        %v300 = vld [vmem:[%s5] sm:$0xff]
        %v301 = vld [vmem:[%s5 + $0x8] sm:$0xff]
        %v302 = vld [vmem:[%s5 + $0x10] sm:$0xff]
        %v303 = vld [vmem:[%s5 + $0x18] sm:$0xff]
        %v304 = vld [vmem:[%s250] sm:$0xff]
        %v305 = vld [vmem:[%s250 + $0x8] sm:$0xff]
        %v306 = vld [vmem:[%s250 + $0x10] sm:$0xff]
        %v307 = vld [vmem:[%s250 + $0x18] sm:$0xff]
        %v308 = vld [vmem:[%s250 + $0x20] sm:$0xff]
        %v309 = vld [vmem:[%s250 + $0x28] sm:$0xff]
        %v310 = vld [vmem:[%s250 + $0x30] sm:$0xff]
        %v311 = vld [vmem:[%s250 + $0x38] sm:$0xff]
        %v312 = vpack.c.bf16 %v306, %v304
        %v313 = vpack.c.bf16 %v307, %v305
        %v314 = vpack.c.bf16 %v310, %v308
        %v315 = vpack.c.bf16 %v311, %v309
        %317 = vset.pattern.permute.xlu0 0
        %318 = vperm.xlu0 %317, %v296
        %v319 = vpop.permute.xlu0 %318
        %322 = vset.pattern.permute.xlu0 0
        %323 = vperm.xlu0 %322, %v297
        %v324 = vpop.permute.xlu0 %323
        %327 = vset.pattern.permute.xlu0 0
        %328 = vperm.xlu0 %327, %v298
        %v329 = vpop.permute.xlu0 %328
        %332 = vset.pattern.permute.xlu0 0
        %333 = vperm.xlu0 %332, %v299
        %v334 = vpop.permute.xlu0 %333
        %v340 = vunpack.c.l.b16 %v288
        %v341 = vunpack.c.l.b16 %v289
        %v342 = vunpack.c.l.b16 %v290
        %v343 = vunpack.c.l.b16 %v291
        %v344 = vpack.c.b16 %v341, %v340
        %v345 = vpack.c.b16 %v343, %v342
        %vm346 = vcmask 261120
        %v348 = vsel %vm346, %v344, 0
        %v351 = vsel %vm346, %v345, 0
        %353 = vmatprep.subr.bf16.mxu0 0
        %354 = vmatpush1.bf16.msra.mxu0 0
        %355 = vmatprep.subr.bf16.mxu0 0
        %356 = vmatpush1.bf16.msra.mxu0 0
        %357 = vmatprep.subr.bf16.mxu0 0
        %358 = vmatpush1.bf16.msra.mxu0 0
        %359 = vmatprep.subr.bf16.mxu0 0
        %360 = vmatpush1.bf16.msra.mxu0 0
        %361 = vmatprep.subr.bf16.mxu0 0
        %362 = vmatpush1.bf16.msra.mxu0 0
        %363 = vmatprep.subr.bf16.mxu0 0
        %364 = vmatpush1.bf16.msra.mxu0 0
        %365 = vmatprep.subr.bf16.mxu0 %v315
        %366 = vmatpush1.bf16.msra.mxu0 %v314
        %367 = vmatprep.subr.bf16.mxu0 %v313
        %368 = vmatpush1.bf16.msra.mxu0 %v312
        %369 = vmatprep.subr.bf16.mxu0 0
        %370 = vmatpush2.bf16.msra.mxu0 0
        %371 = vmatprep.subr.bf16.mxu0 0
        %372 = vmatpush2.bf16.msra.mxu0 0
        %373 = vmatprep.subr.bf16.mxu0 0
        %374 = vmatpush2.bf16.msra.mxu0 0
        %375 = vmatprep.subr.bf16.mxu0 0
        %376 = vmatpush2.bf16.msra.mxu0 0
        %377 = vmatprep.subr.bf16.mxu0 0
        %378 = vmatpush2.bf16.msra.mxu0 0
        %379 = vmatprep.subr.bf16.mxu0 0
        %380 = vmatpush2.bf16.msra.mxu0 0
        %381 = vmatprep.subr.bf16.mxu0 0
        %382 = vmatpush2.bf16.msra.mxu0 0
        %383 = vmatprep.subr.bf16.mxu0 0
        %384 = vmatpush2.bf16.msra.mxu0 0
        %385 = vmatprep.mubr.bf16.mxu0 0
        %386 = vmatmul.mubr.bf16.gmra.mxu0 %v348
        %v387 = vpop.f32.mrf.mxu0
        %v388 = vadd.f32 %v319, %v387
        %v389 = vpop.f32.mrf.mxu0
        %v390 = vadd.f32 %v319, %v389
        %v391 = vpop.f32.mrf.mxu0
        %v392 = vadd.f32 %v324, %v391
        %v393 = vpop.f32.mrf.mxu0
        %v394 = vadd.f32 %v324, %v393
        %395 = vmatprep.mubr.bf16.mxu0 0
        %396 = vmatmul.mubr.bf16.gmra.mxu0 %v351
        %v397 = vpop.f32.mrf.mxu0
        %v398 = vadd.f32 %v329, %v397
        %v399 = vpop.f32.mrf.mxu0
        %v400 = vadd.f32 %v329, %v399
        %v401 = vpop.f32.mrf.mxu0
        %v402 = vadd.f32 %v334, %v401
        %v403 = vpop.f32.mrf.mxu0
        %v404 = vadd.f32 %v334, %v403
        %405 = vdwg.mxu0
        %v406 = vmax.f32 %v388, 0.0
        %v407 = vmax.f32 %v390, 0.0
        %v408 = vmax.f32 %v392, 0.0
        %v409 = vmax.f32 %v394, 0.0
        %v410 = vmax.f32 %v398, 0.0
        %v411 = vmax.f32 %v400, 0.0
        %v412 = vmax.f32 %v402, 0.0
        %v413 = vmax.f32 %v404, 0.0
        %v414 = vld [vmem:[%s286] sm:$0xff]
        %416 = vset.pattern.permute.xlu0 0
        %417 = vperm.xlu0 %416, %v414
        %v418 = vpop.permute.xlu0 %417
        %v420 = vmul.f32 %v418, %v406
        %v421 = vmul.f32 %v418, %v407
        %v422 = vmul.f32 %v418, %v408
        %v423 = vmul.f32 %v418, %v409
        %v424 = vmul.f32 %v418, %v410
        %v425 = vmul.f32 %v418, %v411
        %v426 = vmul.f32 %v418, %v412
        %v427 = vmul.f32 %v418, %v413
        %v428 = vrot.slane %v420, 4
        %v429 = vadd.f32 %v420, %v428
        %v430 = vrot.slane %v429, 2
        %v431 = vadd.f32 %v429, %v430
        %v432 = vrot.slane %v431, 1
        %v433 = vadd.f32 %v431, %v432
        %v434 = vrot.slane %v421, 4
        %v435 = vadd.f32 %v421, %v434
        %v436 = vrot.slane %v435, 2
        %v437 = vadd.f32 %v435, %v436
        %v438 = vrot.slane %v437, 1
        %v439 = vadd.f32 %v437, %v438
        %v440 = vrot.slane %v422, 4
        %v441 = vadd.f32 %v422, %v440
        %v442 = vrot.slane %v441, 2
        %v443 = vadd.f32 %v441, %v442
        %v444 = vrot.slane %v443, 1
        %v445 = vadd.f32 %v443, %v444
        %v446 = vrot.slane %v423, 4
        %v447 = vadd.f32 %v423, %v446
        %v448 = vrot.slane %v447, 2
        %v449 = vadd.f32 %v447, %v448
        %v450 = vrot.slane %v449, 1
        %v451 = vadd.f32 %v449, %v450
        %v452 = vrot.slane %v424, 4
        %v453 = vadd.f32 %v424, %v452
        %v454 = vrot.slane %v453, 2
        %v455 = vadd.f32 %v453, %v454
        %v456 = vrot.slane %v455, 1
        %v457 = vadd.f32 %v455, %v456
        %v458 = vrot.slane %v425, 4
        %v459 = vadd.f32 %v425, %v458
        %v460 = vrot.slane %v459, 2
        %v461 = vadd.f32 %v459, %v460
        %v462 = vrot.slane %v461, 1
        %v463 = vadd.f32 %v461, %v462
        %v464 = vrot.slane %v426, 4
        %v465 = vadd.f32 %v426, %v464
        %v466 = vrot.slane %v465, 2
        %v467 = vadd.f32 %v465, %v466
        %v468 = vrot.slane %v467, 1
        %v469 = vadd.f32 %v467, %v468
        %v470 = vrot.slane %v427, 4
        %v471 = vadd.f32 %v427, %v470
        %v472 = vrot.slane %v471, 2
        %v473 = vadd.f32 %v471, %v472
        %v474 = vrot.slane %v473, 1
        %v475 = vadd.f32 %v473, %v474
        %v476 = vmul.f32 %v406, %v406
        %v477 = vmul.f32 %v407, %v407
        %v478 = vmul.f32 %v408, %v408
        %v479 = vmul.f32 %v409, %v409
        %v480 = vmul.f32 %v410, %v410
        %v481 = vmul.f32 %v411, %v411
        %v482 = vmul.f32 %v412, %v412
        %v483 = vmul.f32 %v413, %v413
        %v484 = vrot.slane %v476, 4
        %v485 = vadd.f32 %v476, %v484
        %v486 = vrot.slane %v485, 2
        %v487 = vadd.f32 %v485, %v486
        %v488 = vrot.slane %v487, 1
        %v489 = vadd.f32 %v487, %v488
        %v490 = vrot.slane %v477, 4
        %v491 = vadd.f32 %v477, %v490
        %v492 = vrot.slane %v491, 2
        %v493 = vadd.f32 %v491, %v492
        %v494 = vrot.slane %v493, 1
        %v495 = vadd.f32 %v493, %v494
        %v496 = vrot.slane %v478, 4
        %v497 = vadd.f32 %v478, %v496
        %v498 = vrot.slane %v497, 2
        %v499 = vadd.f32 %v497, %v498
        %v500 = vrot.slane %v499, 1
        %v501 = vadd.f32 %v499, %v500
        %v502 = vrot.slane %v479, 4
        %v503 = vadd.f32 %v479, %v502
        %v504 = vrot.slane %v503, 2
        %v505 = vadd.f32 %v503, %v504
        %v506 = vrot.slane %v505, 1
        %v507 = vadd.f32 %v505, %v506
        %v508 = vrot.slane %v480, 4
        %v509 = vadd.f32 %v480, %v508
        %v510 = vrot.slane %v509, 2
        %v511 = vadd.f32 %v509, %v510
        %v512 = vrot.slane %v511, 1
        %v513 = vadd.f32 %v511, %v512
        %v514 = vrot.slane %v481, 4
        %v515 = vadd.f32 %v481, %v514
        %v516 = vrot.slane %v515, 2
        %v517 = vadd.f32 %v515, %v516
        %v518 = vrot.slane %v517, 1
        %v519 = vadd.f32 %v517, %v518
        %v520 = vrot.slane %v482, 4
        %v521 = vadd.f32 %v482, %v520
        %v522 = vrot.slane %v521, 2
        %v523 = vadd.f32 %v521, %v522
        %v524 = vrot.slane %v523, 1
        %v525 = vadd.f32 %v523, %v524
        %v526 = vrot.slane %v483, 4
        %v527 = vadd.f32 %v483, %v526
        %v528 = vrot.slane %v527, 2
        %v529 = vadd.f32 %v527, %v528
        %v530 = vrot.slane %v529, 1
        %v531 = vadd.f32 %v529, %v530
        %v532 = vmax.f32 %v489, 1e-24
        %v533 = vmax.f32 %v495, 1e-24
        %v534 = vmax.f32 %v501, 1e-24
        %v535 = vmax.f32 %v507, 1e-24
        %v536 = vmax.f32 %v513, 1e-24
        %v537 = vmax.f32 %v519, 1e-24
        %v538 = vmax.f32 %v525, 1e-24
        %v539 = vmax.f32 %v531, 1e-24
        %v540 = vrsqrt.pop %v532
        %v541 = vrsqrt.pop %v533
        %v542 = vrsqrt.pop %v534
        %v543 = vrsqrt.pop %v535
        %v544 = vrsqrt.pop %v536
        %v545 = vrsqrt.pop %v537
        %v546 = vrsqrt.pop %v538
        %v547 = vrsqrt.pop %v539
        %v548 = vmul.f32 %v433, %v540
        %v549 = vmul.f32 %v439, %v541
        %v550 = vmul.f32 %v445, %v542
        %v551 = vmul.f32 %v451, %v543
        %v552 = vmul.f32 %v457, %v544
        %v553 = vmul.f32 %v463, %v545
        %v554 = vmul.f32 %v469, %v546
        %v555 = vmul.f32 %v475, %v547
        %v556 = vmul.f32 %v406, %v548
        %v557 = vmul.f32 %v407, %v549
        %v558 = vmul.f32 %v408, %v550
        %v559 = vmul.f32 %v409, %v551
        %v560 = vmul.f32 %v410, %v552
        %v561 = vmul.f32 %v411, %v553
        %v562 = vmul.f32 %v412, %v554
        %v563 = vmul.f32 %v413, %v555
        %v564 = vpack.c.bf16 %v558, %v556
        %v565 = vpack.c.bf16 %v559, %v557
        %v566 = vpack.c.bf16 %v562, %v560
        %v567 = vpack.c.bf16 %v563, %v561
        %569 = vset.pattern.permute.xlu0 0
        %570 = vperm.xlu0 %569, %v300
        %v571 = vpop.permute.xlu0 %570
        %574 = vset.pattern.permute.xlu0 0
        %575 = vperm.xlu0 %574, %v301
        %v576 = vpop.permute.xlu0 %575
        %579 = vset.pattern.permute.xlu0 0
        %580 = vperm.xlu0 %579, %v302
        %v581 = vpop.permute.xlu0 %580
        %584 = vset.pattern.permute.xlu0 0
        %585 = vperm.xlu0 %584, %v303
        %v586 = vpop.permute.xlu0 %585
        %v592 = vunpack.c.l.b16 %v292
        %v593 = vunpack.c.l.b16 %v293
        %v594 = vunpack.c.l.b16 %v294
        %v595 = vunpack.c.l.b16 %v295
        %v596 = vpack.c.b16 %v593, %v592
        %v597 = vpack.c.b16 %v595, %v594
        %v599 = vsel %vm346, %v596, 0
        %v602 = vsel %vm346, %v597, 0
        %604 = vmatprep.subr.bf16.mxu0 0
        %605 = vmatpush1.bf16.msra.mxu0 0
        %606 = vmatprep.subr.bf16.mxu0 0
        %607 = vmatpush1.bf16.msra.mxu0 0
        %608 = vmatprep.subr.bf16.mxu0 0
        %609 = vmatpush1.bf16.msra.mxu0 0
        %610 = vmatprep.subr.bf16.mxu0 0
        %611 = vmatpush1.bf16.msra.mxu0 0
        %612 = vmatprep.subr.bf16.mxu0 0
        %613 = vmatpush1.bf16.msra.mxu0 0
        %614 = vmatprep.subr.bf16.mxu0 0
        %615 = vmatpush1.bf16.msra.mxu0 0
        %616 = vmatprep.subr.bf16.mxu0 %v567
        %617 = vmatpush1.bf16.msra.mxu0 %v566
        %618 = vmatprep.subr.bf16.mxu0 %v565
        %619 = vmatpush1.bf16.msra.mxu0 %v564
        %620 = vmatprep.subr.bf16.mxu0 0
        %621 = vmatpush2.bf16.msra.mxu0 0
        %622 = vmatprep.subr.bf16.mxu0 0
        %623 = vmatpush2.bf16.msra.mxu0 0
        %624 = vmatprep.subr.bf16.mxu0 0
        %625 = vmatpush2.bf16.msra.mxu0 0
        %626 = vmatprep.subr.bf16.mxu0 0
        %627 = vmatpush2.bf16.msra.mxu0 0
        %628 = vmatprep.subr.bf16.mxu0 0
        %629 = vmatpush2.bf16.msra.mxu0 0
        %630 = vmatprep.subr.bf16.mxu0 0
        %631 = vmatpush2.bf16.msra.mxu0 0
        %632 = vmatprep.subr.bf16.mxu0 0
        %633 = vmatpush2.bf16.msra.mxu0 0
        %634 = vmatprep.subr.bf16.mxu0 0
        %635 = vmatpush2.bf16.msra.mxu0 0
        %636 = vmatprep.mubr.bf16.mxu0 0
        %637 = vmatmul.mubr.bf16.gmra.mxu0 %v599
        %v638 = vpop.f32.mrf.mxu0
        %v639 = vadd.f32 %v571, %v638
        %v640 = vpop.f32.mrf.mxu0
        %v641 = vadd.f32 %v571, %v640
        %v642 = vpop.f32.mrf.mxu0
        %v643 = vadd.f32 %v576, %v642
        %v644 = vpop.f32.mrf.mxu0
        %v645 = vadd.f32 %v576, %v644
        %646 = vmatprep.mubr.bf16.mxu0 0
        %647 = vmatmul.mubr.bf16.gmra.mxu0 %v602
        %v648 = vpop.f32.mrf.mxu0
        %v649 = vadd.f32 %v581, %v648
        %v650 = vpop.f32.mrf.mxu0
        %v651 = vadd.f32 %v581, %v650
        %v652 = vpop.f32.mrf.mxu0
        %v653 = vadd.f32 %v586, %v652
        %v654 = vpop.f32.mrf.mxu0
        %v655 = vadd.f32 %v586, %v654
        %656 = vdwg.mxu0
        %v657 = vmax.f32 %v639, 0.0
        %v658 = vmax.f32 %v641, 0.0
        %v659 = vmax.f32 %v643, 0.0
        %v660 = vmax.f32 %v645, 0.0
        %v661 = vmax.f32 %v649, 0.0
        %v662 = vmax.f32 %v651, 0.0
        %v663 = vmax.f32 %v653, 0.0
        %v664 = vmax.f32 %v655, 0.0
        %v665 = vpack.c.bf16 %v659, %v657
        %v666 = vpack.c.bf16 %v660, %v658
        %v667 = vpack.c.bf16 %v663, %v661
        %v668 = vpack.c.bf16 %v664, %v662
        %v673 = vunpack.c.l.b16 %v665
        %v674 = vunpack.c.l.b16 %v666
        %v675 = vunpack.c.h.b16 %v665
        %v676 = vunpack.c.h.b16 %v666
        %v677 = vunpack.c.l.b16 %v667
        %v678 = vunpack.c.l.b16 %v668
        %v679 = vunpack.c.h.b16 %v667
        %v680 = vunpack.c.h.b16 %v668
        %v681 = vpack.c.b16 %v674, %v673
        %v682 = vpack.c.b16 %v676, %v675
        %v683 = vpack.c.b16 %v678, %v677
        %v684 = vpack.c.b16 %v680, %v679
        %689 = vst [vmem:[%s282] sm:$0xff] %v681
        %690 = vst [vmem:[%s282 + $0x8] sm:$0xff] %v682
        %691 = vst [vmem:[%s282 + $0x10] sm:$0xff] %v683
        %692 = vst [vmem:[%s282 + $0x18] sm:$0xff] %v684
        %s693 = sand.u32 %s167, 1
        %s694 = scalar_lea.sflag [#allocation4], %s693
        %s695 = sand.u32 %s167, 1
        %s696 = smul.addr %s695, 32
        %s697 = scalar_lea.vmem [#allocation5], %s696
        // Predicated region
        $region49: #{tpu_custom_call.1} parent=43 // pred_check
          %p698 = pneg %p177
        $region50: #{tpu_custom_call.1} parent=43 // pred_check_branch
          %700 = sbr.rel (%p698) target = $region52
        $region51: #{tpu_custom_call.1} parent=43 // pred_region
          %s702 = ssub.s32 512, 512
          %703 = vsyncadd %s694, %s702
          %s704 = smul.addr %s23, 8
          %s705 = smul.addr %s704, 64
          %s706 = scalar_lea.hbm %s6, %s705
          %s707 = sshll.u32 %s697, 4
          %s708 = int_to_ptr.vmem [resolvable:$true] %s707
          %713 = dma.vmem_to_hbm [thread:$0]  %s708, 512, %s706, %s694, 128, 128, 8
        $region52: #{tpu_custom_call.1} parent=43 // pred_fallthru
          _
      $region44: #{tpu_custom_call.1} parent=5 // pred_fallthru
        _
      %p714 = scmp.le.s32.totalorder 2, %s18
      // Predicated region
      $region53: #{tpu_custom_call.1} parent=5 // pred_check
        %p715 = pneg %p714
      $region54: #{tpu_custom_call.1} parent=5 // pred_check_branch
        %717 = sbr.rel (%p715) target = $region56
      $region55: #{tpu_custom_call.1} parent=5 // pred_region
        %s718 = ssub.s32 %s18, 2
        // Predicated region
        $region57: #{tpu_custom_call.1} parent=55 // pred_check
          %p719 = pneg %p183
        $region58: #{tpu_custom_call.1} parent=55 // pred_check_branch
          %721 = sbr.rel (%p719) target = $region60
        $region59: #{tpu_custom_call.1} parent=55 // pred_region
          %s722 = sand.u32 %s168, 1
          %s723 = scalar_lea.sflag [#allocation4], %s722
          %s724 = sand.u32 %s168, 1
          %s725 = smul.addr %s724, 32
          %s726 = scalar_lea.vmem [#allocation5], %s725
          %727 = dma.done %s723, 512
        $region60: #{tpu_custom_call.1} parent=55 // pred_fallthru
          _
      $region56: #{tpu_custom_call.1} parent=5 // pred_fallthru
        _
    $region6: #{tpu_custom_call.1} parent=1 // loop_footer
      %s22 = sadd.s32 1, %s18
    $region7: #{tpu_custom_call.1} parent=1 // loop_footer_branch
      %17 = sbr.rel target = $region3
    $region8: #{tpu_custom_call.1} parent=1 // loop_exit
      _
    %728 = vsyncpa [#allocation3], 1
    %s729 = scalar_lea.sflag [#allocation3], 1
    %730 = vsyncpa %s729, 1
    %731 = vsyncpa [#allocation4], 1
    %s732 = scalar_lea.sflag [#allocation4], 1
    %733 = vsyncpa %s732, 1

</llo_original>
